<compile_context>
chip_gen: v7x
topology: tpu7x:2x2x1
jax: 0.10.0
libtpu: 0.0.40
codegen_flags: <defaults>
</compile_context>

<pallas_src>
import functools

import jax
import jax.numpy as jnp
from jax.experimental import pallas as pl
from jax.experimental.pallas import tpu as pltpu  # noqa: F401  (TPU backend)

LANE = 128  # vreg lane width


# --------------------------------------------------------------------------
# Fused Pallas kernel: whole GCN forward in one invocation
# --------------------------------------------------------------------------
def _gcn_fused_kernel(a_ref, x_ref, w1_ref, b1_ref, w2_ref, b2_ref, o_ref, *,
                      num_classes):
    a = a_ref[...]                                   # (N, N) in VMEM

    # ---- layer 1: relu(A_hat @ (X @ W1) + b1) ----
    h = jnp.dot(x_ref[...], w1_ref[...], preferred_element_type=jnp.float32)
    h = jnp.dot(a, h, preferred_element_type=jnp.float32) + b1_ref[...]
    h = jnp.maximum(h, 0.0)

    # TODO(synk): F.dropout(training=self.training) is identity in eval mode;
    # training-mode dropout (pltpu.prng_*) is intentionally not applied here.

    # ---- layer 2: A_hat @ (H @ W2) + b2 ----
    z = jnp.dot(h, w2_ref[...], preferred_element_type=jnp.float32)
    z = jnp.dot(a, z, preferred_element_type=jnp.float32) + b2_ref[...]

    # ---- log_softmax over the real class lanes (padded lanes masked) ----
    lane = jax.lax.broadcasted_iota(jnp.int32, z.shape, 1)
    z = jnp.where(lane < num_classes, z, -jnp.inf)
    m = jnp.max(z, axis=-1, keepdims=True)
    lse = m + jnp.log(jnp.sum(jnp.exp(z - m), axis=-1, keepdims=True))
    o_ref[...] = z - lse


# --------------------------------------------------------------------------
# Wrapper: lane padding + single pallas_call
# --------------------------------------------------------------------------
def _round_up(x, m):
    return (x + m - 1) // m * m


def _pad_to(arr, shape):
    pads = [(0, t - s) for s, t in zip(arr.shape, shape)]
    return jnp.pad(arr, pads)


def gcn_forward(params, x, a_hat):
    n, f = x.shape
    hidden = params["w1"].shape[1]
    classes = params["w2"].shape[1]
    h_pad = _round_up(hidden, LANE)    # 16  -> 128 (lane-dense intermediates)
    c_pad = _round_up(classes, LANE)   # 4   -> 128 (lane-dense output store)

    w1 = _pad_to(params["w1"], (f, h_pad))
    b1 = _pad_to(params["b1"], (1, h_pad))
    w2 = _pad_to(params["w2"], (h_pad, c_pad))
    b2 = _pad_to(params["b2"], (1, c_pad))

    kernel = functools.partial(_gcn_fused_kernel, num_classes=classes)
    full = lambda i: (0, 0)

    out = pl.pallas_call(
        kernel,
        out_shape=jax.ShapeDtypeStruct((n, c_pad), jnp.float32),
        grid=(1,),  # everything fits in VMEM; single grid point, no tiling
        in_specs=[pl.BlockSpec((n, n), full),        # A_hat
                  pl.BlockSpec((n, f), full),        # X
                  pl.BlockSpec((f, h_pad), full),    # W1 (lane-padded)
                  pl.BlockSpec((1, h_pad), full),    # b1
                  pl.BlockSpec((h_pad, c_pad), full),  # W2 (lane-padded)
                  pl.BlockSpec((1, c_pad), full)],   # b2
        out_specs=pl.BlockSpec((n, c_pad), full),
    )(a_hat, x, w1, b1, w2, b2)

    return out[:, :classes]


# --------------------------------------------------------------------------
# Glue: graph normalization, params, reference
# --------------------------------------------------------------------------
def normalized_adjacency(edge_index, num_nodes):
    """A_hat = D^{-1/2} (A + I) D^{-1/2} as a dense (N, N) float32 matrix."""
    src, dst = edge_index
    a = jnp.zeros((num_nodes, num_nodes), jnp.float32)
    a = a.at[src, dst].max(1.0)                     # dedupe duplicate edges
    a = a + jnp.eye(num_nodes, dtype=jnp.float32)   # add self loops
    deg = jnp.sum(a, axis=1)
    d_inv_sqrt = jax.lax.rsqrt(deg)
    return a * d_inv_sqrt[:, None] * d_inv_sqrt[None, :]


def init_gcn_params(key, num_features, num_classes, hidden=16):
    """Glorot-uniform weights, zero biases (matches PyG GCNConv defaults)."""
    k1, k2 = jax.random.split(key)

    def glorot(k, fin, fout):
        limit = jnp.sqrt(6.0 / (fin + fout))
        return jax.random.uniform(k, (fin, fout), jnp.float32, -limit, limit)

    return {
        "w1": glorot(k1, num_features, hidden),
        "b1": jnp.zeros((1, hidden), jnp.float32),
        "w2": glorot(k2, hidden, num_classes),
        "b2": jnp.zeros((1, num_classes), jnp.float32),
    }


def ref_forward(params, x, a_hat):
    h = jnp.maximum(a_hat @ (x @ params["w1"]) + params["b1"], 0.0)
    z = a_hat @ (h @ params["w2"]) + params["b2"]
    return jax.nn.log_softmax(z, axis=1)


# --------------------------------------------------------------------------
if __name__ == "__main__":
    N = 64            # number of graph nodes
    NUM_FEATURES = 32
    NUM_CLASSES = 4

    key = jax.random.PRNGKey(0)
    k_x, k_e, k_p = jax.random.split(key, 3)

    # Node features (data.x).
    x = jax.random.normal(k_x, (N, NUM_FEATURES), jnp.float32)

    # Deterministic edge_index (data.edge_index): ring graph + random edges,
    # symmetrized.
    idx = jnp.arange(N, dtype=jnp.int32)
    rand_src = jax.random.randint(k_e, (96,), 0, N, dtype=jnp.int32)
    rand_dst = jnp.roll(rand_src, 7)
    src = jnp.concatenate([idx, (idx + 1) % N, rand_src, rand_dst])
    dst = jnp.concatenate([(idx + 1) % N, idx, rand_dst, rand_src])
    edge_index = jnp.stack([src, dst])  # (2, E)

    a_hat = normalized_adjacency(edge_index, N)
    params = init_gcn_params(k_p, NUM_FEATURES, NUM_CLASSES, hidden=16)

    out = jax.jit(gcn_forward)(params, x, a_hat)
    out = jax.block_until_ready(out)

    expected = ref_forward(params, x, a_hat)
    assert out.shape == (N, NUM_CLASSES)
    assert jnp.allclose(out, expected, atol=1e-5, rtol=1e-5), "mismatch vs reference"

    print("KERNEL_OK")
</pallas_src>

<mosaic_0001>
module attributes {stable_mosaic.version = 11 : i64} {
  func.func @_gcn_fused_kernel(%arg0: i32, %arg1: memref<64x64xf32, #tpu.memory_space<vmem>>, %arg2: memref<64x32xf32, #tpu.memory_space<vmem>>, %arg3: memref<32x128xf32, #tpu.memory_space<vmem>>, %arg4: memref<1x128xf32, #tpu.memory_space<vmem>>, %arg5: memref<128x128xf32, #tpu.memory_space<vmem>>, %arg6: memref<1x128xf32, #tpu.memory_space<vmem>>, %arg7: memref<64x128xf32, #tpu.memory_space<vmem>>) attributes {dimension_semantics = [#tpu.dimension_semantics<arbitrary>], iteration_bounds = array<i64: 1>, scalar_prefetch = 0 : i64, scratch_operands = 0 : i64, tpu.core_type = #tpu.core_type<tc>, window_params = [{pipeline_mode = #tpu.pipeline_mode<synchronous>, transform_indices = @transform_0, window_bounds = array<i64: 64, 64>}, {pipeline_mode = #tpu.pipeline_mode<synchronous>, transform_indices = @transform_1, window_bounds = array<i64: 64, 32>}, {pipeline_mode = #tpu.pipeline_mode<synchronous>, transform_indices = @transform_2, window_bounds = array<i64: 32, 128>}, {pipeline_mode = #tpu.pipeline_mode<synchronous>, transform_indices = @transform_3, window_bounds = array<i64: 1, 128>}, {pipeline_mode = #tpu.pipeline_mode<synchronous>, transform_indices = @transform_4, window_bounds = array<i64: 128, 128>}, {pipeline_mode = #tpu.pipeline_mode<synchronous>, transform_indices = @transform_5, window_bounds = array<i64: 1, 128>}, {pipeline_mode = #tpu.pipeline_mode<synchronous>, transform_indices = @transform_6, window_bounds = array<i64: 64, 128>}]} {
    %c0 = arith.constant 0 : index
    %c0_0 = arith.constant 0 : index
    %0 = vector.load %arg1[%c0, %c0_0] : memref<64x64xf32, #tpu.memory_space<vmem>>, vector<64x64xf32>
    %c0_1 = arith.constant 0 : index
    %c0_2 = arith.constant 0 : index
    %1 = vector.load %arg2[%c0_1, %c0_2] : memref<64x32xf32, #tpu.memory_space<vmem>>, vector<64x32xf32>
    %c0_3 = arith.constant 0 : index
    %c0_4 = arith.constant 0 : index
    %2 = vector.load %arg3[%c0_3, %c0_4] : memref<32x128xf32, #tpu.memory_space<vmem>>, vector<32x128xf32>
    %cst = arith.constant dense<0.000000e+00> : vector<64x128xf32>
    %3 = tpu.matmul %1, %2, %cst {dimension_numbers = #tpu.dot_dimension_numbers<[1], [0], [0], [1], [0, 0, 1, 1], [], []>} : vector<64x32xf32>, vector<32x128xf32>, vector<64x128xf32> -> vector<64x128xf32>
    %cst_5 = arith.constant dense<0.000000e+00> : vector<64x128xf32>
    %4 = tpu.matmul %0, %3, %cst_5 {dimension_numbers = #tpu.dot_dimension_numbers<[1], [0], [0], [1], [0, 0, 1, 1], [], []>} : vector<64x64xf32>, vector<64x128xf32>, vector<64x128xf32> -> vector<64x128xf32>
    %c0_6 = arith.constant 0 : index
    %c0_7 = arith.constant 0 : index
    %5 = vector.load %arg4[%c0_6, %c0_7] : memref<1x128xf32, #tpu.memory_space<vmem>>, vector<1x128xf32>
    %6 = vector.broadcast %5 : vector<1x128xf32> to vector<64x128xf32>
    %7 = arith.addf %4, %6 : vector<64x128xf32>
    %cst_8 = arith.constant 0.000000e+00 : f32
    %8 = vector.broadcast %cst_8 : f32 to vector<64x128xf32>
    %9 = arith.maximumf %7, %8 : vector<64x128xf32>
    %c0_9 = arith.constant 0 : index
    %c0_10 = arith.constant 0 : index
    %10 = vector.load %arg5[%c0_9, %c0_10] : memref<128x128xf32, #tpu.memory_space<vmem>>, vector<128x128xf32>
    %cst_11 = arith.constant dense<0.000000e+00> : vector<64x128xf32>
    %11 = tpu.matmul %9, %10, %cst_11 {dimension_numbers = #tpu.dot_dimension_numbers<[1], [0], [0], [1], [0, 0, 1, 1], [], []>} : vector<64x128xf32>, vector<128x128xf32>, vector<64x128xf32> -> vector<64x128xf32>
    %cst_12 = arith.constant dense<0.000000e+00> : vector<64x128xf32>
    %12 = tpu.matmul %0, %11, %cst_12 {dimension_numbers = #tpu.dot_dimension_numbers<[1], [0], [0], [1], [0, 0, 1, 1], [], []>} : vector<64x64xf32>, vector<64x128xf32>, vector<64x128xf32> -> vector<64x128xf32>
    %c0_13 = arith.constant 0 : index
    %c0_14 = arith.constant 0 : index
    %13 = vector.load %arg6[%c0_13, %c0_14] : memref<1x128xf32, #tpu.memory_space<vmem>>, vector<1x128xf32>
    %14 = vector.broadcast %13 : vector<1x128xf32> to vector<64x128xf32>
    %15 = arith.addf %12, %14 : vector<64x128xf32>
    %16 = tpu.iota {dimensions = array<i32: 1>} : vector<64x128xi32>
    %c4_i32 = arith.constant 4 : i32
    %17 = vector.broadcast %c4_i32 : i32 to vector<64x128xi32>
    %18 = arith.cmpi slt, %16, %17 : vector<64x128xi32>
    %cst_15 = arith.constant 0xFF800000 : f32
    %19 = vector.broadcast %cst_15 : f32 to vector<64x128xf32>
    %20 = arith.select %18, %15, %19 : vector<64x128xi1>, vector<64x128xf32>
    %cst_16 = arith.constant dense<0xFF800000> : vector<64xf32>
    %21 = vector.multi_reduction <maximumf>, %20, %cst_16 [1] : vector<64x128xf32> to vector<64xf32>
    %22 = vector.shape_cast %21 : vector<64xf32> to vector<64x1xf32>
    %23 = vector.broadcast %22 : vector<64x1xf32> to vector<64x128xf32>
    %24 = arith.subf %20, %23 : vector<64x128xf32>
    %25 = math.exp %24 : vector<64x128xf32>
    %cst_17 = arith.constant dense<0.000000e+00> : vector<64xf32>
    %26 = vector.multi_reduction <add>, %25, %cst_17 [1] : vector<64x128xf32> to vector<64xf32>
    %27 = vector.shape_cast %26 : vector<64xf32> to vector<64x1xf32>
    %28 = math.log %27 : vector<64x1xf32>
    %29 = arith.addf %22, %28 : vector<64x1xf32>
    %30 = vector.broadcast %29 : vector<64x1xf32> to vector<64x128xf32>
    %31 = arith.subf %20, %30 : vector<64x128xf32>
    %c0_18 = arith.constant 0 : index
    %c0_19 = arith.constant 0 : index
    %32 = vector.load %arg7[%c0_18, %c0_19] : memref<64x128xf32, #tpu.memory_space<vmem>>, vector<64x128xf32>
    tpu.vector_store %arg7[%c0_18, %c0_19], %31 {strides = array<i32>} : memref<64x128xf32, #tpu.memory_space<vmem>>, vector<64x128xf32>,
    return
  }
  func.func @transform_0(%arg0: i32) -> (i32, i32) {
    %c0_i32 = arith.constant 0 : i32
    %c0_i32_0 = arith.constant 0 : i32
    %c0_i32_1 = arith.constant 0 : i32
    return %c0_i32, %c0_i32_0 : i32, i32
  }
  func.func @transform_1(%arg0: i32) -> (i32, i32) {
    %c0_i32 = arith.constant 0 : i32
    %c0_i32_0 = arith.constant 0 : i32
    %c0_i32_1 = arith.constant 0 : i32
    return %c0_i32, %c0_i32_0 : i32, i32
  }
  func.func @transform_2(%arg0: i32) -> (i32, i32) {
    %c0_i32 = arith.constant 0 : i32
    %c0_i32_0 = arith.constant 0 : i32
    %c0_i32_1 = arith.constant 0 : i32
    return %c0_i32, %c0_i32_0 : i32, i32
  }
  func.func @transform_3(%arg0: i32) -> (i32, i32) {
    %c0_i32 = arith.constant 0 : i32
    %c0_i32_0 = arith.constant 0 : i32
    %c0_i32_1 = arith.constant 0 : i32
    return %c0_i32, %c0_i32_0 : i32, i32
  }
  func.func @transform_4(%arg0: i32) -> (i32, i32) {
    %c0_i32 = arith.constant 0 : i32
    %c0_i32_0 = arith.constant 0 : i32
    %c0_i32_1 = arith.constant 0 : i32
    return %c0_i32, %c0_i32_0 : i32, i32
  }
  func.func @transform_5(%arg0: i32) -> (i32, i32) {
    %c0_i32 = arith.constant 0 : i32
    %c0_i32_0 = arith.constant 0 : i32
    %c0_i32_1 = arith.constant 0 : i32
    return %c0_i32, %c0_i32_0 : i32, i32
  }
  func.func @transform_6(%arg0: i32) -> (i32, i32) {
    %c0_i32 = arith.constant 0 : i32
    %c0_i32_0 = arith.constant 0 : i32
    %c0_i32_1 = arith.constant 0 : i32
    return %c0_i32, %c0_i32_0 : i32, i32
  }
}

</mosaic_0001>

<llo_original>
// kernel: gcn_forward.1
$region0: #{gcn_forward.1}
  #allocation0 [shape = 'u32[]', space=smem, size = 0x4, offset = 0x4, fixed_abs, tag = 'smem constant byte address 0x4 - core index']
  #allocation1 [shape = 'u32[144,128]{1,0:T(1,128)}', space=vmem, size = 0x12000, scoped, tag = 'internal scratch']
  %s0 = inlined_call_operand.vmem [shape: f32[64,64], index: 0, kind: input, shape index: {}]
  %s1 = inlined_call_operand.vmem [shape: f32[64,32], index: 1, kind: input, shape index: {}]
  %s2 = inlined_call_operand.vmem [shape: f32[32,128], index: 2, kind: input, shape index: {}]
  %s3 = inlined_call_operand.vmem [shape: f32[1,128], index: 3, kind: input, shape index: {}]
  %s4 = inlined_call_operand.vmem [shape: f32[128,128], index: 4, kind: input, shape index: {}]
  %s5 = inlined_call_operand.vmem [shape: f32[1,128], index: 5, kind: input, shape index: {}]
  %s6 = inlined_call_operand.vmem [shape: f32[64,128], index: 6, kind: output, shape index: {}]
  %s7 = sld [smem:[#allocation0]]
  $region34: #{gcn_forward.1} parent=0
    _
  %s9 = ssub.s32 1, %s7
  %s10 = scalar_select 0, %s9, %s7
  // Predicated region
  $region2: #{gcn_forward.1} parent=0 // pred_check
    _
  $region3: #{gcn_forward.1} parent=0 // pred_check_branch
    %12 = sbr.rel (0) target = $region5
  $region4: #{gcn_forward.1} parent=0 // pred_region
    _
  $region5: #{gcn_forward.1} parent=0 // pred_fallthru
    _
  // Predicated region
  $region6: #{gcn_forward.1} parent=0 // pred_check
    _
  $region7: #{gcn_forward.1} parent=0 // pred_check_branch
    %14 = sbr.rel (0) target = $region9
  $region8: #{gcn_forward.1} parent=0 // pred_region
    _
  $region9: #{gcn_forward.1} parent=0 // pred_fallthru
    _
  // Predicated region
  $region10: #{gcn_forward.1} parent=0 // pred_check
    _
  $region11: #{gcn_forward.1} parent=0 // pred_check_branch
    %16 = sbr.rel (0) target = $region13
  $region12: #{gcn_forward.1} parent=0 // pred_region
    _
  $region13: #{gcn_forward.1} parent=0 // pred_fallthru
    _
  // Predicated region
  $region14: #{gcn_forward.1} parent=0 // pred_check
    _
  $region15: #{gcn_forward.1} parent=0 // pred_check_branch
    %18 = sbr.rel (0) target = $region17
  $region16: #{gcn_forward.1} parent=0 // pred_region
    _
  $region17: #{gcn_forward.1} parent=0 // pred_fallthru
    _
  // Predicated region
  $region18: #{gcn_forward.1} parent=0 // pred_check
    _
  $region19: #{gcn_forward.1} parent=0 // pred_check_branch
    %20 = sbr.rel (0) target = $region21
  $region20: #{gcn_forward.1} parent=0 // pred_region
    _
  $region21: #{gcn_forward.1} parent=0 // pred_fallthru
    _
  // Predicated region
  $region22: #{gcn_forward.1} parent=0 // pred_check
    _
  $region23: #{gcn_forward.1} parent=0 // pred_check_branch
    %22 = sbr.rel (0) target = $region25
  $region24: #{gcn_forward.1} parent=0 // pred_region
    _
  $region25: #{gcn_forward.1} parent=0 // pred_fallthru
    _
  %v23 = vld [vmem:[%s0] sm:$0xff]
  %v24 = vld [vmem:[%s0 + $0x8] sm:$0xff]
  %v25 = vld [vmem:[%s0 + $0x10] sm:$0xff]
  %v26 = vld [vmem:[%s0 + $0x18] sm:$0xff]
  %v27 = vld [vmem:[%s0 + $0x20] sm:$0xff]
  %v28 = vld [vmem:[%s0 + $0x28] sm:$0xff]
  %v29 = vld [vmem:[%s0 + $0x30] sm:$0xff]
  %v30 = vld [vmem:[%s0 + $0x38] sm:$0xff]
  %v31 = vld [vmem:[%s1] sm:$0xff]
  %v32 = vld [vmem:[%s1 + $0x8] sm:$0xff]
  %v33 = vld [vmem:[%s1 + $0x10] sm:$0xff]
  %v34 = vld [vmem:[%s1 + $0x18] sm:$0xff]
  %v35 = vld [vmem:[%s1 + $0x20] sm:$0xff]
  %v36 = vld [vmem:[%s1 + $0x28] sm:$0xff]
  %v37 = vld [vmem:[%s1 + $0x30] sm:$0xff]
  %v38 = vld [vmem:[%s1 + $0x38] sm:$0xff]
  %v39 = vld [vmem:[%s2] sm:$0xff]
  %v40 = vld [vmem:[%s2 + $0x8] sm:$0xff]
  %v41 = vld [vmem:[%s2 + $0x10] sm:$0xff]
  %v42 = vld [vmem:[%s2 + $0x18] sm:$0xff]
  %vm43 = vcmask 261120
  %v45 = vsel %vm43, %v31, 0
  %v48 = vsel %vm43, %v32, 0
  %v51 = vsel %vm43, %v33, 0
  %v54 = vsel %vm43, %v34, 0
  %v57 = vsel %vm43, %v35, 0
  %v60 = vsel %vm43, %v36, 0
  %v63 = vsel %vm43, %v37, 0
  %v66 = vsel %vm43, %v38, 0
  %68 = vmatprep.subr.mxu0 0.0
  %69 = vmatpush1.msra.mxu0 %v39
  %70 = vmatprep.subr.mxu0 0.0
  %71 = vmatpush1.msra.mxu0 %v40
  %72 = vmatprep.subr.mxu0 0.0
  %73 = vmatpush1.msra.mxu0 %v41
  %74 = vmatprep.subr.mxu0 0.0
  %75 = vmatpush1.msra.mxu0 %v42
  %76 = vmatprep.subr.mxu0 0.0
  %77 = vmatpush1.msra.mxu0 0.0
  %78 = vmatprep.subr.mxu0 0.0
  %79 = vmatpush1.msra.mxu0 0.0
  %80 = vmatprep.subr.mxu0 0.0
  %81 = vmatpush1.msra.mxu0 0.0
  %82 = vmatprep.subr.mxu0 0.0
  %83 = vmatpush1.msra.mxu0 0.0
  %84 = vmatprep.subr.mxu0 0.0
  %85 = vmatpush1.msra.mxu0 0.0
  %86 = vmatprep.subr.mxu0 0.0
  %87 = vmatpush1.msra.mxu0 0.0
  %88 = vmatprep.subr.mxu0 0.0
  %89 = vmatpush1.msra.mxu0 0.0
  %90 = vmatprep.subr.mxu0 0.0
  %91 = vmatpush1.msra.mxu0 0.0
  %92 = vmatprep.subr.mxu0 0.0
  %93 = vmatpush1.msra.mxu0 0.0
  %94 = vmatprep.subr.mxu0 0.0
  %95 = vmatpush1.msra.mxu0 0.0
  %96 = vmatprep.subr.mxu0 0.0
  %97 = vmatpush1.msra.mxu0 0.0
  %98 = vmatprep.subr.mxu0 0.0
  %99 = vmatpush1.msra.mxu0 0.0
  %100 = vmatprep.subr.mxu0 0.0
  %101 = vmatpush1.msra.mxu0 0.0
  %102 = vmatprep.subr.mxu0 0.0
  %103 = vmatpush1.msra.mxu0 0.0
  %104 = vmatprep.subr.mxu0 0.0
  %105 = vmatpush1.msra.mxu0 0.0
  %106 = vmatprep.subr.mxu0 0.0
  %107 = vmatpush1.msra.mxu0 0.0
  %108 = vmatprep.subr.mxu0 0.0
  %109 = vmatpush1.msra.mxu0 0.0
  %110 = vmatprep.subr.mxu0 0.0
  %111 = vmatpush1.msra.mxu0 0.0
  %112 = vmatprep.subr.mxu0 0.0
  %113 = vmatpush1.msra.mxu0 0.0
  %114 = vmatprep.subr.mxu0 0.0
  %115 = vmatpush1.msra.mxu0 0.0
  %116 = vmatprep.subr.mxu0 0.0
  %117 = vmatpush1.msra.mxu0 0.0
  %118 = vmatprep.subr.mxu0 0.0
  %119 = vmatpush1.msra.mxu0 0.0
  %120 = vmatprep.subr.mxu0 0.0
  %121 = vmatpush1.msra.mxu0 0.0
  %122 = vmatprep.subr.mxu0 0.0
  %123 = vmatpush1.msra.mxu0 0.0
  %124 = vmatprep.subr.mxu0 0.0
  %125 = vmatpush1.msra.mxu0 0.0
  %126 = vmatprep.subr.mxu0 0.0
  %127 = vmatpush1.msra.mxu0 0.0
  %128 = vmatprep.subr.mxu0 0.0
  %129 = vmatpush1.msra.mxu0 0.0
  %130 = vmatprep.subr.mxu0 0.0
  %131 = vmatpush1.msra.mxu0 0.0
  %132 = vmatprep.mubr.f32.mxu0 0.0
  %133 = vmatmul.mubr.f32.gmra.mrb[0].mxu0 %v45
  %v134 = vpop.f32.mrb[0].mxu0
  %v135 = vadd.f32 0.0, %v134
  %v136 = vpop.f32.mrb[0].mxu0
  %137 = vmatprep.mubr.f32.mxu0 0.0
  %138 = vmatmul.mubr.f32.gmra.mrb[0].mxu0 %v48
  %v139 = vpop.f32.mrb[0].mxu0
  %v140 = vadd.f32 0.0, %v139
  %v141 = vpop.f32.mrb[0].mxu0
  %142 = vmatprep.mubr.f32.mxu0 0.0
  %143 = vmatmul.mubr.f32.gmra.mrb[0].mxu0 %v51
  %v144 = vpop.f32.mrb[0].mxu0
  %v145 = vadd.f32 0.0, %v144
  %v146 = vpop.f32.mrb[0].mxu0
  %147 = vmatprep.mubr.f32.mxu0 0.0
  %148 = vmatmul.mubr.f32.gmra.mrb[0].mxu0 %v54
  %v149 = vpop.f32.mrb[0].mxu0
  %v150 = vadd.f32 0.0, %v149
  %v151 = vpop.f32.mrb[0].mxu0
  %152 = vmatprep.mubr.f32.mxu0 0.0
  %153 = vmatmul.mubr.f32.gmra.mrb[0].mxu0 %v57
  %v154 = vpop.f32.mrb[0].mxu0
  %v155 = vadd.f32 0.0, %v154
  %v156 = vpop.f32.mrb[0].mxu0
  %157 = vmatprep.mubr.f32.mxu0 0.0
  %158 = vmatmul.mubr.f32.gmra.mrb[0].mxu0 %v60
  %v159 = vpop.f32.mrb[0].mxu0
  %v160 = vadd.f32 0.0, %v159
  %v161 = vpop.f32.mrb[0].mxu0
  %162 = vmatprep.mubr.f32.mxu0 0.0
  %163 = vmatmul.mubr.f32.gmra.mrb[0].mxu0 %v63
  %v164 = vpop.f32.mrb[0].mxu0
  %v165 = vadd.f32 0.0, %v164
  %v166 = vpop.f32.mrb[0].mxu0
  %167 = vmatprep.mubr.f32.mxu0 0.0
  %168 = vmatmul.mubr.f32.gmra.mrb[0].mxu0 %v66
  %v169 = vpop.f32.mrb[0].mxu0
  %v170 = vadd.f32 0.0, %v169
  %v171 = vpop.f32.mrb[0].mxu0
  %172 = vdwg.mxu0
  %v173 = vld [vmem:[%s3] sm:$0x1]
  %v175 = vlaneseq
  %v176 = vshrl.u32 %v175, 7
  %v177 = vsub.s32 0, %v176
  %v178 = vrot.slane %v173, %v177
  %vm180 = vcmask 523264
  %v182 = vsel %vm180, %v23, 0
  %v185 = vsel %vm180, %v24, 0
  %v188 = vsel %vm180, %v25, 0
  %v191 = vsel %vm180, %v26, 0
  %v194 = vsel %vm180, %v27, 0
  %v197 = vsel %vm180, %v28, 0
  %v200 = vsel %vm180, %v29, 0
  %v203 = vsel %vm180, %v30, 0
  %205 = vmatprep.subr.mxu0 0.0
  %206 = vmatpush1.msra.mxu0 %v135
  %207 = vmatprep.subr.mxu0 0.0
  %208 = vmatpush1.msra.mxu0 %v140
  %209 = vmatprep.subr.mxu0 0.0
  %210 = vmatpush1.msra.mxu0 %v145
  %211 = vmatprep.subr.mxu0 0.0
  %212 = vmatpush1.msra.mxu0 %v150
  %213 = vmatprep.subr.mxu0 0.0
  %214 = vmatpush1.msra.mxu0 %v155
  %215 = vmatprep.subr.mxu0 0.0
  %216 = vmatpush1.msra.mxu0 %v160
  %217 = vmatprep.subr.mxu0 0.0
  %218 = vmatpush1.msra.mxu0 %v165
  %219 = vmatprep.subr.mxu0 0.0
  %220 = vmatpush1.msra.mxu0 %v170
  %221 = vmatprep.subr.mxu0 0.0
  %222 = vmatpush1.msra.mxu0 0.0
  %223 = vmatprep.subr.mxu0 0.0
  %224 = vmatpush1.msra.mxu0 0.0
  %225 = vmatprep.subr.mxu0 0.0
  %226 = vmatpush1.msra.mxu0 0.0
  %227 = vmatprep.subr.mxu0 0.0
  %228 = vmatpush1.msra.mxu0 0.0
  %229 = vmatprep.subr.mxu0 0.0
  %230 = vmatpush1.msra.mxu0 0.0
  %231 = vmatprep.subr.mxu0 0.0
  %232 = vmatpush1.msra.mxu0 0.0
  %233 = vmatprep.subr.mxu0 0.0
  %234 = vmatpush1.msra.mxu0 0.0
  %235 = vmatprep.subr.mxu0 0.0
  %236 = vmatpush1.msra.mxu0 0.0
  %237 = vmatprep.subr.mxu0 0.0
  %238 = vmatpush1.msra.mxu0 0.0
  %239 = vmatprep.subr.mxu0 0.0
  %240 = vmatpush1.msra.mxu0 0.0
  %241 = vmatprep.subr.mxu0 0.0
  %242 = vmatpush1.msra.mxu0 0.0
  %243 = vmatprep.subr.mxu0 0.0
  %244 = vmatpush1.msra.mxu0 0.0
  %245 = vmatprep.subr.mxu0 0.0
  %246 = vmatpush1.msra.mxu0 0.0
  %247 = vmatprep.subr.mxu0 0.0
  %248 = vmatpush1.msra.mxu0 0.0
  %249 = vmatprep.subr.mxu0 0.0
  %250 = vmatpush1.msra.mxu0 0.0
  %251 = vmatprep.subr.mxu0 0.0
  %252 = vmatpush1.msra.mxu0 0.0
  %253 = vmatprep.subr.mxu0 0.0
  %254 = vmatpush1.msra.mxu0 0.0
  %255 = vmatprep.subr.mxu0 0.0
  %256 = vmatpush1.msra.mxu0 0.0
  %257 = vmatprep.subr.mxu0 0.0
  %258 = vmatpush1.msra.mxu0 0.0
  %259 = vmatprep.subr.mxu0 0.0
  %260 = vmatpush1.msra.mxu0 0.0
  %261 = vmatprep.subr.mxu0 0.0
  %262 = vmatpush1.msra.mxu0 0.0
  %263 = vmatprep.subr.mxu0 0.0
  %264 = vmatpush1.msra.mxu0 0.0
  %265 = vmatprep.subr.mxu0 0.0
  %266 = vmatpush1.msra.mxu0 0.0
  %267 = vmatprep.subr.mxu0 0.0
  %268 = vmatpush1.msra.mxu0 0.0
  %269 = vmatprep.mubr.f32.mxu0 0.0
  %270 = vmatmul.mubr.f32.gmra.mrb[0].mxu0 %v182
  %v271 = vpop.f32.mrb[0].mxu0
  %v272 = vadd.f32 %v178, %v271
  %v273 = vpop.f32.mrb[0].mxu0
  %274 = vmatprep.mubr.f32.mxu0 0.0
  %275 = vmatmul.mubr.f32.gmra.mrb[0].mxu0 %v185
  %v276 = vpop.f32.mrb[0].mxu0
  %v277 = vadd.f32 %v178, %v276
  %v278 = vpop.f32.mrb[0].mxu0
  %279 = vmatprep.mubr.f32.mxu0 0.0
  %280 = vmatmul.mubr.f32.gmra.mrb[0].mxu0 %v188
  %v281 = vpop.f32.mrb[0].mxu0
  %v282 = vadd.f32 %v178, %v281
  %v283 = vpop.f32.mrb[0].mxu0
  %284 = vmatprep.mubr.f32.mxu0 0.0
  %285 = vmatmul.mubr.f32.gmra.mrb[0].mxu0 %v191
  %v286 = vpop.f32.mrb[0].mxu0
  %v287 = vadd.f32 %v178, %v286
  %v288 = vpop.f32.mrb[0].mxu0
  %289 = vmatprep.mubr.f32.mxu0 0.0
  %290 = vmatmul.mubr.f32.gmra.mrb[0].mxu0 %v194
  %v291 = vpop.f32.mrb[0].mxu0
  %v292 = vadd.f32 %v178, %v291
  %v293 = vpop.f32.mrb[0].mxu0
  %294 = vmatprep.mubr.f32.mxu0 0.0
  %295 = vmatmul.mubr.f32.gmra.mrb[0].mxu0 %v197
  %v296 = vpop.f32.mrb[0].mxu0
  %v297 = vadd.f32 %v178, %v296
  %v298 = vpop.f32.mrb[0].mxu0
  %299 = vmatprep.mubr.f32.mxu0 0.0
  %300 = vmatmul.mubr.f32.gmra.mrb[0].mxu0 %v200
  %v301 = vpop.f32.mrb[0].mxu0
  %v302 = vadd.f32 %v178, %v301
  %v303 = vpop.f32.mrb[0].mxu0
  %304 = vmatprep.mubr.f32.mxu0 0.0
  %305 = vmatmul.mubr.f32.gmra.mrb[0].mxu0 %v203
  %v306 = vpop.f32.mrb[0].mxu0
  %v307 = vadd.f32 %v178, %v306
  %v308 = vpop.f32.mrb[0].mxu0
  %309 = vdwg.mxu0
  %v310 = vmax.f32 %v272, 0.0
  %v311 = vmax.f32 %v277, 0.0
  %v312 = vmax.f32 %v282, 0.0
  %v313 = vmax.f32 %v287, 0.0
  %v314 = vmax.f32 %v292, 0.0
  %v315 = vmax.f32 %v297, 0.0
  %v316 = vmax.f32 %v302, 0.0
  %v317 = vmax.f32 %v307, 0.0
  %v318 = vld [vmem:[%s4] sm:$0xff]
  %v319 = vld [vmem:[%s4 + $0x8] sm:$0xff]
  %v320 = vld [vmem:[%s4 + $0x10] sm:$0xff]
  %v321 = vld [vmem:[%s4 + $0x18] sm:$0xff]
  %v322 = vld [vmem:[%s4 + $0x20] sm:$0xff]
  %v323 = vld [vmem:[%s4 + $0x28] sm:$0xff]
  %v324 = vld [vmem:[%s4 + $0x30] sm:$0xff]
  %v325 = vld [vmem:[%s4 + $0x38] sm:$0xff]
  %v326 = vld [vmem:[%s4 + $0x40] sm:$0xff]
  %v327 = vld [vmem:[%s4 + $0x48] sm:$0xff]
  %v328 = vld [vmem:[%s4 + $0x50] sm:$0xff]
  %v329 = vld [vmem:[%s4 + $0x58] sm:$0xff]
  %v330 = vld [vmem:[%s4 + $0x60] sm:$0xff]
  %v331 = vld [vmem:[%s4 + $0x68] sm:$0xff]
  %v332 = vld [vmem:[%s4 + $0x70] sm:$0xff]
  %v333 = vld [vmem:[%s4 + $0x78] sm:$0xff]
  %334 = vmatprep.subr.mxu0 0.0
  %335 = vmatpush1.msra.mxu0 %v318
  %336 = vmatprep.subr.mxu0 0.0
  %337 = vmatpush1.msra.mxu0 %v319
  %338 = vmatprep.subr.mxu0 0.0
  %339 = vmatpush1.msra.mxu0 %v320
  %340 = vmatprep.subr.mxu0 0.0
  %341 = vmatpush1.msra.mxu0 %v321
  %342 = vmatprep.subr.mxu0 0.0
  %343 = vmatpush1.msra.mxu0 %v322
  %344 = vmatprep.subr.mxu0 0.0
  %345 = vmatpush1.msra.mxu0 %v323
  %346 = vmatprep.subr.mxu0 0.0
  %347 = vmatpush1.msra.mxu0 %v324
  %348 = vmatprep.subr.mxu0 0.0
  %349 = vmatpush1.msra.mxu0 %v325
  %350 = vmatprep.subr.mxu0 0.0
  %351 = vmatpush1.msra.mxu0 %v326
  %352 = vmatprep.subr.mxu0 0.0
  %353 = vmatpush1.msra.mxu0 %v327
  %354 = vmatprep.subr.mxu0 0.0
  %355 = vmatpush1.msra.mxu0 %v328
  %356 = vmatprep.subr.mxu0 0.0
  %357 = vmatpush1.msra.mxu0 %v329
  %358 = vmatprep.subr.mxu0 0.0
  %359 = vmatpush1.msra.mxu0 %v330
  %360 = vmatprep.subr.mxu0 0.0
  %361 = vmatpush1.msra.mxu0 %v331
  %362 = vmatprep.subr.mxu0 0.0
  %363 = vmatpush1.msra.mxu0 %v332
  %364 = vmatprep.subr.mxu0 0.0
  %365 = vmatpush1.msra.mxu0 %v333
  %366 = vmatprep.subr.mxu0 0.0
  %367 = vmatpush1.msra.mxu0 0.0
  %368 = vmatprep.subr.mxu0 0.0
  %369 = vmatpush1.msra.mxu0 0.0
  %370 = vmatprep.subr.mxu0 0.0
  %371 = vmatpush1.msra.mxu0 0.0
  %372 = vmatprep.subr.mxu0 0.0
  %373 = vmatpush1.msra.mxu0 0.0
  %374 = vmatprep.subr.mxu0 0.0
  %375 = vmatpush1.msra.mxu0 0.0
  %376 = vmatprep.subr.mxu0 0.0
  %377 = vmatpush1.msra.mxu0 0.0
  %378 = vmatprep.subr.mxu0 0.0
  %379 = vmatpush1.msra.mxu0 0.0
  %380 = vmatprep.subr.mxu0 0.0
  %381 = vmatpush1.msra.mxu0 0.0
  %382 = vmatprep.subr.mxu0 0.0
  %383 = vmatpush1.msra.mxu0 0.0
  %384 = vmatprep.subr.mxu0 0.0
  %385 = vmatpush1.msra.mxu0 0.0
  %386 = vmatprep.subr.mxu0 0.0
  %387 = vmatpush1.msra.mxu0 0.0
  %388 = vmatprep.subr.mxu0 0.0
  %389 = vmatpush1.msra.mxu0 0.0
  %390 = vmatprep.subr.mxu0 0.0
  %391 = vmatpush1.msra.mxu0 0.0
  %392 = vmatprep.subr.mxu0 0.0
  %393 = vmatpush1.msra.mxu0 0.0
  %394 = vmatprep.subr.mxu0 0.0
  %395 = vmatpush1.msra.mxu0 0.0
  %396 = vmatprep.subr.mxu0 0.0
  %397 = vmatpush1.msra.mxu0 0.0
  %398 = vmatprep.mubr.f32.mxu0 0.0
  %399 = vmatmul.mubr.f32.gmra.mrb[0].mxu0 %v310
  %v400 = vpop.f32.mrb[0].mxu0
  %v401 = vadd.f32 0.0, %v400
  %v402 = vpop.f32.mrb[0].mxu0
  %403 = vmatprep.mubr.f32.mxu0 0.0
  %404 = vmatmul.mubr.f32.gmra.mrb[0].mxu0 %v311
  %v405 = vpop.f32.mrb[0].mxu0
  %v406 = vadd.f32 0.0, %v405
  %v407 = vpop.f32.mrb[0].mxu0
  %408 = vmatprep.mubr.f32.mxu0 0.0
  %409 = vmatmul.mubr.f32.gmra.mrb[0].mxu0 %v312
  %v410 = vpop.f32.mrb[0].mxu0
  %v411 = vadd.f32 0.0, %v410
  %v412 = vpop.f32.mrb[0].mxu0
  %413 = vmatprep.mubr.f32.mxu0 0.0
  %414 = vmatmul.mubr.f32.gmra.mrb[0].mxu0 %v313
  %v415 = vpop.f32.mrb[0].mxu0
  %v416 = vadd.f32 0.0, %v415
  %v417 = vpop.f32.mrb[0].mxu0
  %418 = vmatprep.mubr.f32.mxu0 0.0
  %419 = vmatmul.mubr.f32.gmra.mrb[0].mxu0 %v314
  %v420 = vpop.f32.mrb[0].mxu0
  %v421 = vadd.f32 0.0, %v420
  %v422 = vpop.f32.mrb[0].mxu0
  %423 = vmatprep.mubr.f32.mxu0 0.0
  %424 = vmatmul.mubr.f32.gmra.mrb[0].mxu0 %v315
  %v425 = vpop.f32.mrb[0].mxu0
  %v426 = vadd.f32 0.0, %v425
  %v427 = vpop.f32.mrb[0].mxu0
  %428 = vmatprep.mubr.f32.mxu0 0.0
  %429 = vmatmul.mubr.f32.gmra.mrb[0].mxu0 %v316
  %v430 = vpop.f32.mrb[0].mxu0
  %v431 = vadd.f32 0.0, %v430
  %v432 = vpop.f32.mrb[0].mxu0
  %433 = vmatprep.mubr.f32.mxu0 0.0
  %434 = vmatmul.mubr.f32.gmra.mrb[0].mxu0 %v317
  %v435 = vpop.f32.mrb[0].mxu0
  %v436 = vadd.f32 0.0, %v435
  %v437 = vpop.f32.mrb[0].mxu0
  %438 = vdwg.mxu0
  %v439 = vld [vmem:[%s5] sm:$0x1]
  %v441 = vlaneseq
  %v442 = vshrl.u32 %v441, 7
  %v443 = vsub.s32 0, %v442
  %v444 = vrot.slane %v439, %v443
  %446 = vmatprep.subr.mxu0 0.0
  %447 = vmatpush1.msra.mxu0 %v401
  %448 = vmatprep.subr.mxu0 0.0
  %449 = vmatpush1.msra.mxu0 %v406
  %450 = vmatprep.subr.mxu0 0.0
  %451 = vmatpush1.msra.mxu0 %v411
  %452 = vmatprep.subr.mxu0 0.0
  %453 = vmatpush1.msra.mxu0 %v416
  %454 = vmatprep.subr.mxu0 0.0
  %455 = vmatpush1.msra.mxu0 %v421
  %456 = vmatprep.subr.mxu0 0.0
  %457 = vmatpush1.msra.mxu0 %v426
  %458 = vmatprep.subr.mxu0 0.0
  %459 = vmatpush1.msra.mxu0 %v431
  %460 = vmatprep.subr.mxu0 0.0
  %461 = vmatpush1.msra.mxu0 %v436
  %462 = vmatprep.subr.mxu0 0.0
  %463 = vmatpush1.msra.mxu0 0.0
  %464 = vmatprep.subr.mxu0 0.0
  %465 = vmatpush1.msra.mxu0 0.0
  %466 = vmatprep.subr.mxu0 0.0
  %467 = vmatpush1.msra.mxu0 0.0
  %468 = vmatprep.subr.mxu0 0.0
  %469 = vmatpush1.msra.mxu0 0.0
  %470 = vmatprep.subr.mxu0 0.0
  %471 = vmatpush1.msra.mxu0 0.0
  %472 = vmatprep.subr.mxu0 0.0
  %473 = vmatpush1.msra.mxu0 0.0
  %474 = vmatprep.subr.mxu0 0.0
  %475 = vmatpush1.msra.mxu0 0.0
  %476 = vmatprep.subr.mxu0 0.0
  %477 = vmatpush1.msra.mxu0 0.0
  %478 = vmatprep.subr.mxu0 0.0
  %479 = vmatpush1.msra.mxu0 0.0
  %480 = vmatprep.subr.mxu0 0.0
  %481 = vmatpush1.msra.mxu0 0.0
  %482 = vmatprep.subr.mxu0 0.0
  %483 = vmatpush1.msra.mxu0 0.0
  %484 = vmatprep.subr.mxu0 0.0
  %485 = vmatpush1.msra.mxu0 0.0
  %486 = vmatprep.subr.mxu0 0.0
  %487 = vmatpush1.msra.mxu0 0.0
  %488 = vmatprep.subr.mxu0 0.0
  %489 = vmatpush1.msra.mxu0 0.0
  %490 = vmatprep.subr.mxu0 0.0
  %491 = vmatpush1.msra.mxu0 0.0
  %492 = vmatprep.subr.mxu0 0.0
  %493 = vmatpush1.msra.mxu0 0.0
  %494 = vmatprep.subr.mxu0 0.0
  %495 = vmatpush1.msra.mxu0 0.0
  %496 = vmatprep.subr.mxu0 0.0
  %497 = vmatpush1.msra.mxu0 0.0
  %498 = vmatprep.subr.mxu0 0.0
  %499 = vmatpush1.msra.mxu0 0.0
  %500 = vmatprep.subr.mxu0 0.0
  %501 = vmatpush1.msra.mxu0 0.0
  %502 = vmatprep.subr.mxu0 0.0
  %503 = vmatpush1.msra.mxu0 0.0
  %504 = vmatprep.subr.mxu0 0.0
  %505 = vmatpush1.msra.mxu0 0.0
  %506 = vmatprep.subr.mxu0 0.0
  %507 = vmatpush1.msra.mxu0 0.0
  %508 = vmatprep.subr.mxu0 0.0
  %509 = vmatpush1.msra.mxu0 0.0
  %510 = vmatprep.mubr.f32.mxu0 0.0
  %511 = vmatmul.mubr.f32.gmra.mrb[0].mxu0 %v182
  %v512 = vpop.f32.mrb[0].mxu0
  %v513 = vadd.f32 %v444, %v512
  %v514 = vpop.f32.mrb[0].mxu0
  %515 = vmatprep.mubr.f32.mxu0 0.0
  %516 = vmatmul.mubr.f32.gmra.mrb[0].mxu0 %v185
  %v517 = vpop.f32.mrb[0].mxu0
  %v518 = vadd.f32 %v444, %v517
  %v519 = vpop.f32.mrb[0].mxu0
  %520 = vmatprep.mubr.f32.mxu0 0.0
  %521 = vmatmul.mubr.f32.gmra.mrb[0].mxu0 %v188
  %v522 = vpop.f32.mrb[0].mxu0
  %v523 = vadd.f32 %v444, %v522
  %v524 = vpop.f32.mrb[0].mxu0
  %525 = vmatprep.mubr.f32.mxu0 0.0
  %526 = vmatmul.mubr.f32.gmra.mrb[0].mxu0 %v191
  %v527 = vpop.f32.mrb[0].mxu0
  %v528 = vadd.f32 %v444, %v527
  %v529 = vpop.f32.mrb[0].mxu0
  %530 = vmatprep.mubr.f32.mxu0 0.0
  %531 = vmatmul.mubr.f32.gmra.mrb[0].mxu0 %v194
  %v532 = vpop.f32.mrb[0].mxu0
  %v533 = vadd.f32 %v444, %v532
  %v534 = vpop.f32.mrb[0].mxu0
  %535 = vmatprep.mubr.f32.mxu0 0.0
  %536 = vmatmul.mubr.f32.gmra.mrb[0].mxu0 %v197
  %v537 = vpop.f32.mrb[0].mxu0
  %v538 = vadd.f32 %v444, %v537
  %v539 = vpop.f32.mrb[0].mxu0
  %540 = vmatprep.mubr.f32.mxu0 0.0
  %541 = vmatmul.mubr.f32.gmra.mrb[0].mxu0 %v200
  %v542 = vpop.f32.mrb[0].mxu0
  %v543 = vadd.f32 %v444, %v542
  %v544 = vpop.f32.mrb[0].mxu0
  %545 = vmatprep.mubr.f32.mxu0 0.0
  %546 = vmatmul.mubr.f32.gmra.mrb[0].mxu0 %v203
  %v547 = vpop.f32.mrb[0].mxu0
  %v548 = vadd.f32 %v444, %v547
  %v549 = vpop.f32.mrb[0].mxu0
  %550 = vdwg.mxu0
  %v551 = vlaneseq
  %v552 = vand.u32 %v551, 127
  %vm553 = vcmp.lt.s32.totalorder %v552, 4
  %v554 = vsel %vm553, %v513, -inf
  %v555 = vsel %vm553, %v518, -inf
  %v556 = vsel %vm553, %v523, -inf
  %v557 = vsel %vm553, %v528, -inf
  %v558 = vsel %vm553, %v533, -inf
  %v559 = vsel %vm553, %v538, -inf
  %v560 = vsel %vm553, %v543, -inf
  %v561 = vsel %vm553, %v548, -inf
  %562 = vmax.xlane.f32.xlu0 %v554
  %v563 = vpop.xlane.xlu0 %562
  %564 = vmax.xlane.f32.xlu0 %v555
  %v565 = vpop.xlane.xlu0 %564
  %566 = vmax.xlane.f32.xlu0 %v556
  %v567 = vpop.xlane.xlu0 %566
  %568 = vmax.xlane.f32.xlu0 %v557
  %v569 = vpop.xlane.xlu0 %568
  %570 = vmax.xlane.f32.xlu0 %v558
  %v571 = vpop.xlane.xlu0 %570
  %572 = vmax.xlane.f32.xlu0 %v559
  %v573 = vpop.xlane.xlu0 %572
  %574 = vmax.xlane.f32.xlu0 %v560
  %v575 = vpop.xlane.xlu0 %574
  %576 = vmax.xlane.f32.xlu0 %v561
  %v577 = vpop.xlane.xlu0 %576
  %v578 = vsub.f32 %v554, %v563
  %v579 = vsub.f32 %v555, %v565
  %v580 = vsub.f32 %v556, %v567
  %v581 = vsub.f32 %v557, %v569
  %v582 = vsub.f32 %v558, %v571
  %v583 = vsub.f32 %v559, %v573
  %v584 = vsub.f32 %v560, %v575
  %v585 = vsub.f32 %v561, %v577
  %v586 = vmul.f32 %v578, 1.442695
  %v587 = vpow.pop %v586
  %v588 = vmul.f32 %v579, 1.442695
  %v589 = vpow.pop %v588
  %v590 = vmul.f32 %v580, 1.442695
  %v591 = vpow.pop %v590
  %v592 = vmul.f32 %v581, 1.442695
  %v593 = vpow.pop %v592
  %v594 = vmul.f32 %v582, 1.442695
  %v595 = vpow.pop %v594
  %v596 = vmul.f32 %v583, 1.442695
  %v597 = vpow.pop %v596
  %v598 = vmul.f32 %v584, 1.442695
  %v599 = vpow.pop %v598
  %v600 = vmul.f32 %v585, 1.442695
  %v601 = vpow.pop %v600
  %602 = vadd.xlane.f32.xlu0 %v587
  %v603 = vpop.xlane.xlu0 %602
  %604 = vadd.xlane.f32.xlu0 %v589
  %v605 = vpop.xlane.xlu0 %604
  %606 = vadd.xlane.f32.xlu0 %v591
  %v607 = vpop.xlane.xlu0 %606
  %608 = vadd.xlane.f32.xlu0 %v593
  %v609 = vpop.xlane.xlu0 %608
  %610 = vadd.xlane.f32.xlu0 %v595
  %v611 = vpop.xlane.xlu0 %610
  %612 = vadd.xlane.f32.xlu0 %v597
  %v613 = vpop.xlane.xlu0 %612
  %614 = vadd.xlane.f32.xlu0 %v599
  %v615 = vpop.xlane.xlu0 %614
  %616 = vadd.xlane.f32.xlu0 %v601
  %v617 = vpop.xlane.xlu0 %616
  %v618 = vlog2.pop %v603
  %v619 = vmul.f32 %v618, 0.6931472
  %v620 = vlog2.pop %v605
  %v621 = vmul.f32 %v620, 0.6931472
  %v622 = vlog2.pop %v607
  %v623 = vmul.f32 %v622, 0.6931472
  %v624 = vlog2.pop %v609
  %v625 = vmul.f32 %v624, 0.6931472
  %v626 = vlog2.pop %v611
  %v627 = vmul.f32 %v626, 0.6931472
  %v628 = vlog2.pop %v613
  %v629 = vmul.f32 %v628, 0.6931472
  %v630 = vlog2.pop %v615
  %v631 = vmul.f32 %v630, 0.6931472
  %v632 = vlog2.pop %v617
  %v633 = vmul.f32 %v632, 0.6931472
  %v634 = vadd.f32 %v563, %v619
  %v635 = vadd.f32 %v565, %v621
  %v636 = vadd.f32 %v567, %v623
  %v637 = vadd.f32 %v569, %v625
  %v638 = vadd.f32 %v571, %v627
  %v639 = vadd.f32 %v573, %v629
  %v640 = vadd.f32 %v575, %v631
  %v641 = vadd.f32 %v577, %v633
  %v642 = vsub.f32 %v554, %v634
  %v643 = vsub.f32 %v555, %v635
  %v644 = vsub.f32 %v556, %v636
  %v645 = vsub.f32 %v557, %v637
  %v646 = vsub.f32 %v558, %v638
  %v647 = vsub.f32 %v559, %v639
  %v648 = vsub.f32 %v560, %v640
  %v649 = vsub.f32 %v561, %v641
  %650 = vst [vmem:[%s6] sm:$0xff] %v642
  %651 = vst [vmem:[%s6 + $0x8] sm:$0xff] %v643
  %652 = vst [vmem:[%s6 + $0x10] sm:$0xff] %v644
  %653 = vst [vmem:[%s6 + $0x18] sm:$0xff] %v645
  %654 = vst [vmem:[%s6 + $0x20] sm:$0xff] %v646
  %655 = vst [vmem:[%s6 + $0x28] sm:$0xff] %v647
  %656 = vst [vmem:[%s6 + $0x30] sm:$0xff] %v648
  %657 = vst [vmem:[%s6 + $0x38] sm:$0xff] %v649
  // Predicated region
  $region26: #{gcn_forward.1} parent=0 // pred_check
    _
  $region27: #{gcn_forward.1} parent=0 // pred_check_branch
    %659 = sbr.rel (0) target = $region29
  $region28: #{gcn_forward.1} parent=0 // pred_region
    _
  $region29: #{gcn_forward.1} parent=0 // pred_fallthru
    _
  // Predicated region
  $region30: #{gcn_forward.1} parent=0 // pred_check
    _
  $region31: #{gcn_forward.1} parent=0 // pred_check_branch
    %661 = sbr.rel (0) target = $region33
  $region32: #{gcn_forward.1} parent=0 // pred_region
    _
  $region33: #{gcn_forward.1} parent=0 // pred_fallthru
    _

</llo_original>
